<compile_context>
chip_gen: v5e
topology: v5e:2x2
jax: 0.10.0
libtpu: 0.0.40
codegen_flags: <defaults>
</compile_context>

<pallas_src>
import math

import jax
import jax.numpy as jnp
from jax.experimental import pallas as pl
from jax.experimental.pallas import tpu as pltpu


def _scale_kernel(s_ref, x_ref, o_ref):
    # One scalar load from SMEM + vreg splat, then a VPU multiply on the tile.
    # Mem-bound overall; the multiply is hidden under the DMA pipeline.
    o_ref[...] = (x_ref[...] * s_ref[0, 0]).astype(o_ref.dtype)


def normface_forward(logits: jax.Array, labels: jax.Array, s,
                     *, donate_logits: bool = False) -> jax.Array:
    """Reproduces NORMFACE.forward(logits, labels) -> logits * s."""
    del labels  # unused by the reference module's forward

    orig_shape = logits.shape
    total = int(math.prod(orig_shape)) if orig_shape else 1
    itemsize = jnp.dtype(logits.dtype).itemsize

    # --- choose a lane-dense 2-D view (elementwise op => free to re-view) ---
    last = None
    for cand in (1024, 512, 256, 128):
        if total % cand == 0:
            last = cand
            break
    if last is None:
        # TODO(synk): element count not a multiple of 128 -> fall back to a
        # (rows, V) view with a full-extent last dim (masked partial-lane
        # stores on the edge); fine for small/odd shapes.
        last = orig_shape[-1] if orig_shape else 1
        rows = max(1, total // last)
    else:
        rows = total // last

    x2 = logits.reshape(rows, last)

    # --- tile rows by BYTES (~4 MiB per tile), multiples of 8, full width ---
    target_tile_bytes = 4 * 1024 * 1024
    budget_rows = max(1, target_tile_bytes // (last * itemsize))
    bm = max(8, (budget_rows // 8) * 8)
    if rows <= bm:
        if rows >= 16:
            # Whole array fits one tile: split into 2 blocks so v7x's two
            # TensorCores both get work (bm stays a multiple of 8).
            bm = ((rows + 15) // 16) * 8
        else:
            bm = rows  # full extent: always a legal block shape

    grid = (pl.cdiv(rows, bm),)

    # Runtime scalar scale -> SMEM (1, 1); works for Python floats and tracers.
    s_arr = jnp.asarray(s, dtype=jnp.float32).reshape(1, 1)

    out2 = pl.pallas_call(
        _scale_kernel,
        out_shape=jax.ShapeDtypeStruct((rows, last), logits.dtype),
        grid=grid,
        in_specs=[
            pl.BlockSpec(memory_space=pltpu.MemorySpace.SMEM),  # s
            pl.BlockSpec((bm, last), lambda i: (i, 0)),          # logits tile
        ],
        out_specs=pl.BlockSpec((bm, last), lambda i: (i, 0)),
        input_output_aliases=({1: 0} if donate_logits else {}),
        compiler_params=pltpu.CompilerParams(
            dimension_semantics=("parallel",),
            vmem_limit_bytes=32 * 1024 * 1024,
        ),
    )(s_arr, x2)

    return out2.reshape(orig_shape)


if __name__ == "__main__":
    key = jax.random.PRNGKey(0)
    k_logits, k_labels = jax.random.split(key)

    # Small shapes consistent with the module: (batch, seq, vocab).
    B, S, V = 2, 8, 256
    s = 16.0  # NORMFACE scale parameter

    logits = jax.random.normal(k_logits, (B, S, V), dtype=jnp.float32)
    labels = jax.random.randint(k_labels, (B, S), 0, V, dtype=jnp.int32)

    out = normface_forward(logits, labels, s)
    out = jax.block_until_ready(out)

    ref = logits * s
    assert out.shape == logits.shape and out.dtype == logits.dtype
    assert bool(jnp.allclose(out, ref, rtol=1e-6, atol=1e-6))
    print("KERNEL_OK")
</pallas_src>

<mosaic_0001>
module attributes {stable_mosaic.version = 11 : i64} {
  func.func @_scale_kernel(%arg0: i32, %arg1: memref<1x1xf32, #tpu.memory_space<smem>>, %arg2: memref<4x1024xf32, #tpu.memory_space<vmem>>, %arg3: memref<4x1024xf32, #tpu.memory_space<vmem>>) attributes {dimension_semantics = [#tpu.dimension_semantics<parallel>], iteration_bounds = array<i64: 1>, scalar_prefetch = 0 : i64, scratch_operands = 0 : i64, tpu.core_type = #tpu.core_type<tc>, window_params = [{transform_indices = @transform_0, window_bounds = array<i64: 1, 1>}, {transform_indices = @transform_1, window_bounds = array<i64: 4, 1024>}, {transform_indices = @transform_2, window_bounds = array<i64: 4, 1024>}]} {
    %c0 = arith.constant 0 : index
    %c0_0 = arith.constant 0 : index
    %0 = vector.load %arg2[%c0, %c0_0] : memref<4x1024xf32, #tpu.memory_space<vmem>>, vector<4x1024xf32>
    %c0_1 = arith.constant 0 : index
    %c0_2 = arith.constant 0 : index
    %1 = memref.load %arg1[%c0_1, %c0_2] : memref<1x1xf32, #tpu.memory_space<smem>>
    %2 = vector.broadcast %1 : f32 to vector<4x1024xf32>
    %3 = arith.mulf %0, %2 : vector<4x1024xf32>
    %c0_3 = arith.constant 0 : index
    %c0_4 = arith.constant 0 : index
    %4 = vector.load %arg3[%c0_3, %c0_4] : memref<4x1024xf32, #tpu.memory_space<vmem>>, vector<4x1024xf32>
    tpu.vector_store %arg3[%c0_3, %c0_4], %3 {strides = array<i32>} : memref<4x1024xf32, #tpu.memory_space<vmem>>, vector<4x1024xf32>,
    return
  }
  func.func @transform_0(%arg0: i32) -> (i32, i32) {
    %c0_i32 = arith.constant 0 : i32
    %c0_i32_0 = arith.constant 0 : i32
    %c0_i32_1 = arith.constant 0 : i32
    return %c0_i32, %c0_i32_0 : i32, i32
  }
  func.func @transform_1(%arg0: i32) -> (i32, i32) {
    %c0_i32 = arith.constant 0 : i32
    %c0_i32_0 = arith.constant 0 : i32
    return %arg0, %c0_i32 : i32, i32
  }
  func.func @transform_2(%arg0: i32) -> (i32, i32) {
    %c0_i32 = arith.constant 0 : i32
    %c0_i32_0 = arith.constant 0 : i32
    return %arg0, %c0_i32 : i32, i32
  }
}

</mosaic_0001>

<llo_original>
// kernel: tpu_custom_call.1
$region0: #{tpu_custom_call.1}
  #allocation0 [shape = 'u32[]', space=smem, size = 0x4, offset = 0x4, fixed_abs, tag = 'smem constant byte address 0x4 - core index']
  #allocation1 [shape = 'u32[72,128]{1,0:T(1,128)}', space=vmem, size = 0x9000, scoped, tag = 'internal scratch']
  #allocation2 [shape = 'f32[1,1]{1,0:T(1,128)S(6)}', space=smem, size = 0x200, scoped, tag = 'scoped memory for tpu_custom_call.1']
  %s0 = inlined_call_operand.<no memory space> [shape: f32[1,1], index: 0, kind: input, shape index: {}]
  %s1 = inlined_call_operand.hbm [shape: f32[4,1024], index: 1, kind: input, shape index: {}]
  %s2 = inlined_call_operand.hbm [shape: f32[4,1024], index: 2, kind: output, shape index: {}]
  %s3 = sld [smem:[#allocation0]]
  $region22: #{tpu_custom_call.1} parent=0
    _
  %s5 = ssub.s32 1, %s3
  %s6 = scalar_select 0, %s5, %s3
  %7 = sst [smem:[#allocation2]] %s0
  $region1: #{tpu_custom_call.1} parent=0
    #allocation3 [shape = 'u8[16384]{0}', space=vmem, size = 0x4000, scoped, tag = 'input window, operand 1, single buffered']
    #allocation4 [shape = 's32[1]{0}', space=sflag, size = 0x4, scoped, tag = 'scoped memory for tpu_custom_call.1']
    #allocation5 [shape = 's32[1]{0}', space=sflag, size = 0x4, scoped, tag = 'scoped memory for tpu_custom_call.1']
    #allocation6 [shape = 'u8[16384]{0}', space=vmem, size = 0x4000, scoped, tag = 'output window, operand 0, single buffered']
    %8 = vsyncpa [#allocation4], 0
    %9 = vsyncpa [#allocation5], 0
    // Predicated region
    $region2: #{tpu_custom_call.1} parent=1 // pred_check
      _
    $region3: #{tpu_custom_call.1} parent=1 // pred_check_branch
      %11 = sbr.rel (0) target = $region5
    $region4: #{tpu_custom_call.1} parent=1 // pred_region
      _
    $region5: #{tpu_custom_call.1} parent=1 // pred_fallthru
      _
    // Predicated region
    $region6: #{tpu_custom_call.1} parent=1 // pred_check
      _
    $region7: #{tpu_custom_call.1} parent=1 // pred_check_branch
      %13 = sbr.rel (0) target = $region9
    $region8: #{tpu_custom_call.1} parent=1 // pred_region
      %15 = vsyncadd [#allocation4], 0
      %s17 = sshll.u32 %s1, 4
      %s18 = int_to_ptr.hbm [resolvable:$true] %s17
      %s19 = sshll.u32 [#allocation3], 4
      %s20 = int_to_ptr.vmem [resolvable:$true] %s19
      %22 = dma.hbm_to_vmem [thread:$0]  %s18, 512, %s20, [#allocation4]
    $region9: #{tpu_custom_call.1} parent=1 // pred_fallthru
      _
    // Predicated region
    $region10: #{tpu_custom_call.1} parent=1 // pred_check
      _
    $region11: #{tpu_custom_call.1} parent=1 // pred_check_branch
      %24 = sbr.rel (0) target = $region13
    $region12: #{tpu_custom_call.1} parent=1 // pred_region
      %26 = dma.done [#allocation4], 512
    $region13: #{tpu_custom_call.1} parent=1 // pred_fallthru
      _
    %v27 = vld [vmem:[#allocation3] sm:$0xff]
    %v28 = vld [vmem:[#allocation3 + $0x8] sm:$0xff]
    %v29 = vld [vmem:[#allocation3 + $0x10] sm:$0xff]
    %v30 = vld [vmem:[#allocation3 + $0x18] sm:$0xff]
    %s31 = sld [smem:[#allocation2]]
    %v32 = vstv %s31
    %v33 = vmul.f32 %v27, %v32
    %v34 = vmul.f32 %v28, %v32
    %v35 = vmul.f32 %v29, %v32
    %v36 = vmul.f32 %v30, %v32
    %37 = vst [vmem:[#allocation6] sm:$0xff] %v33
    %38 = vst [vmem:[#allocation6 + $0x8] sm:$0xff] %v34
    %39 = vst [vmem:[#allocation6 + $0x10] sm:$0xff] %v35
    %40 = vst [vmem:[#allocation6 + $0x18] sm:$0xff] %v36
    // Predicated region
    $region14: #{tpu_custom_call.1} parent=1 // pred_check
      _
    $region15: #{tpu_custom_call.1} parent=1 // pred_check_branch
      %42 = sbr.rel (0) target = $region17
    $region16: #{tpu_custom_call.1} parent=1 // pred_region
      %44 = vsyncadd [#allocation5], 0
      %s46 = sshll.u32 [#allocation6], 4
      %s47 = int_to_ptr.vmem [resolvable:$true] %s46
      %s48 = sshll.u32 %s2, 4
      %s49 = int_to_ptr.hbm [resolvable:$true] %s48
      %51 = dma.vmem_to_hbm [thread:$0]  %s47, 512, %s49, [#allocation5]
    $region17: #{tpu_custom_call.1} parent=1 // pred_fallthru
      _
    // Predicated region
    $region18: #{tpu_custom_call.1} parent=1 // pred_check
      _
    $region19: #{tpu_custom_call.1} parent=1 // pred_check_branch
      %53 = sbr.rel (0) target = $region21
    $region20: #{tpu_custom_call.1} parent=1 // pred_region
      %55 = dma.done [#allocation5], 512
    $region21: #{tpu_custom_call.1} parent=1 // pred_fallthru
      _
    %56 = vsyncpa [#allocation4], 1
    %57 = vsyncpa [#allocation5], 1

</llo_original>
